<compile_context>
chip_gen: v7x
topology: tpu7x:2x2x1
jax: 0.10.0
libtpu: 0.0.40
codegen_flags: <defaults>
</compile_context>

<pallas_src>
import jax
import jax.numpy as jnp
import numpy as np
from jax.experimental import pallas as pl
from jax.experimental.pallas import tpu as pltpu


def attention_kernel(x_ref, w_ref, ctx_ref, attn_ref):
    # x_ref:   (BB, T, H) batch tile of lstm_output
    # w_ref:   (1, H)     Linear(hidden_dim, 1, bias=False) weight (x dtype)
    # ctx_ref: (BB, H)    context-vector output block
    # attn_ref:(BB, T)    attention-weight output block
    x = x_ref[...]                                   # (BB, T, H), native dtype
    w = w_ref[...]                                   # (1, H),     native dtype

    # scores = x @ w^T, as a VPU multiply + last-axis (lane/XLU) reduce with
    # f32 accumulation.  No MXU, no transpose/relayout of the big x tile.
    s = jnp.sum(x * w[None, :, :], axis=-1, dtype=jnp.float32)        # (BB, T)

    # softmax over the time axis (PyTorch dim=1), in f32.
    s_max = jnp.max(s, axis=1, keepdims=True)                         # (BB, 1)
    e = jnp.exp(s - s_max)                                            # (BB, T)
    denom = jnp.sum(e, axis=1, keepdims=True)                         # (BB, 1)
    # EUP approximate reciprocal + one Newton step: ~eps^2 relative error,
    # essentially free, still matches the exact divide at 1e-5.
    r = pl.reciprocal(denom, approx=True)
    r = r * (2.0 - denom * r)
    attn = e * r                                                      # (BB, T)

    # context = attn @ x per batch row: VPU weighted sum over the time axis
    # (sublane reduce), accumulated in f32.
    ctx = jnp.sum(attn[:, :, None] * x, axis=1)                       # (BB, H)

    ctx_ref[...] = ctx.astype(ctx_ref.dtype)
    attn_ref[...] = attn.astype(attn_ref.dtype)


def _pick_block_b(B, T, H, itemsize, *,
                  tile_budget_bytes=2 * 1024 * 1024, min_grid_steps=4):
    """Pick the batch block size:
      * per-step x tile <= ~2 MiB (double-buffered <= ~4 MiB -> big headroom
        even on v7x's 64 MiB VMEM),
      * multiple of 8 (sublane constraint on the (block_b, H)/(block_b, T)
        output blocks),
      * grid length >= min_grid_steps when B allows, so each of v7x's two
        TensorCores keeps >= 2 steps and retains prefetch/writeback overlap.
    """
    per_batch = max(1, T * H * itemsize)
    bb = max(8, (tile_budget_bytes // per_batch) // 8 * 8)
    bb = min(bb, max(8, pl.cdiv(B, 8) * 8))               # no point exceeding B
    target_steps = min(min_grid_steps, pl.cdiv(B, 8))     # best achievable
    while bb > 8 and pl.cdiv(B, bb) < target_steps:
        bb = max(8, (bb // 2) // 8 * 8)
    return int(bb)


def attention_pallas(lstm_output, weight, *, block_b=None):
    """lstm_output: (B, T, H), weight: (1, H).
    Returns (context (B, H), attention_weights (B, T))."""
    B, T, H = lstm_output.shape
    assert weight.shape == (1, H)
    dtype = lstm_output.dtype
    itemsize = jnp.dtype(dtype).itemsize

    # Tiny weight: cast wrapper-side so the in-kernel multiply never promotes
    # the whole x tile (accumulation stays f32 inside the kernel).
    weight = weight.astype(dtype)

    if block_b is None:
        block_b = _pick_block_b(B, T, H, itemsize)

    # Ragged last block (if B % block_b != 0) is handled by Pallas masked
    # stores — no full-array jnp.pad copy in HBM.
    grid = (pl.cdiv(B, block_b),)

    grid_spec = pltpu.PrefetchScalarGridSpec(
        num_scalar_prefetch=0,
        grid=grid,
        in_specs=[
            pl.BlockSpec((block_b, T, H), lambda b: (b, 0, 0)),  # batch tile of x
            pl.BlockSpec((1, H), lambda b: (0, 0)),              # shared weight
        ],
        out_specs=[
            pl.BlockSpec((block_b, H), lambda b: (b, 0)),        # context
            pl.BlockSpec((block_b, T), lambda b: (b, 0)),        # attention
        ],
    )

    cost = pl.CostEstimate(
        flops=4 * B * T * H,                  # scores + context weighted sums
        transcendentals=B * T,                # exp in softmax
        bytes_accessed=(B * T * H + H + B * H + B * T) * itemsize,
    )

    ctx, attn = pl.pallas_call(
        attention_kernel,
        out_shape=(
            jax.ShapeDtypeStruct((B, H), dtype),
            jax.ShapeDtypeStruct((B, T), dtype),
        ),
        grid_spec=grid_spec,
        compiler_params=pltpu.CompilerParams(
            dimension_semantics=("parallel",),
            # True footprint: 2 x (<=2 MiB x tile) + small outputs/intermediates.
            # 32 MiB is within every generation's scoped limit (v7x default).
            vmem_limit_bytes=32 * 1024 * 1024,
        ),
        cost_estimate=cost,
    )(lstm_output, weight)

    return ctx, attn


def attention_ref(lstm_output, weight):
    # Pure-JAX reference mirroring the PyTorch forward.
    scores = jnp.einsum("bth,oh->bto", lstm_output, weight)[..., 0]   # (B, T)
    attn = jax.nn.softmax(scores, axis=1)                             # (B, T)
    ctx = jnp.einsum("bt,bth->bh", attn, lstm_output)                 # (B, H)
    return ctx, attn


if __name__ == "__main__":
    B, T, H = 16, 8, 32
    key = jax.random.PRNGKey(0)
    k_x, k_w = jax.random.split(key)

    lstm_output = jax.random.normal(k_x, (B, T, H), dtype=jnp.float32)
    # nn.Linear(hidden_dim, 1, bias=False) default init: U(-1/sqrt(H), 1/sqrt(H))
    bound = 1.0 / np.sqrt(H)
    weight = jax.random.uniform(k_w, (1, H), dtype=jnp.float32,
                                minval=-bound, maxval=bound)

    ctx, attn = attention_pallas(lstm_output, weight)
    jax.block_until_ready((ctx, attn))

    ctx_ref, attn_ref_v = attention_ref(lstm_output, weight)
    np.testing.assert_allclose(np.asarray(ctx), np.asarray(ctx_ref),
                               rtol=1e-5, atol=1e-5)
    np.testing.assert_allclose(np.asarray(attn), np.asarray(attn_ref_v),
                               rtol=1e-5, atol=1e-5)

    print("KERNEL_OK")
</pallas_src>

<mosaic_0001>
module attributes {stable_mosaic.version = 11 : i64} {
  func.func @attention_kernel(%arg0: i32, %arg1: memref<8x8x32xf32, #tpu.memory_space<vmem>>, %arg2: memref<1x32xf32, #tpu.memory_space<vmem>>, %arg3: memref<8x32xf32, #tpu.memory_space<vmem>>, %arg4: memref<8x8xf32, #tpu.memory_space<vmem>>) attributes {dimension_semantics = [#tpu.dimension_semantics<parallel>], iteration_bounds = array<i64: 2>, scalar_prefetch = 0 : i64, scratch_operands = 0 : i64, tpu.core_type = #tpu.core_type<tc>, window_params = [{transform_indices = @transform_0, window_bounds = array<i64: 8, 8, 32>}, {pipeline_mode = #tpu.pipeline_mode<synchronous>, transform_indices = @transform_1, window_bounds = array<i64: 1, 32>}, {transform_indices = @transform_2, window_bounds = array<i64: 8, 32>}, {transform_indices = @transform_3, window_bounds = array<i64: 8, 8>}]} {
    %c0 = arith.constant 0 : index
    %c0_0 = arith.constant 0 : index
    %c0_1 = arith.constant 0 : index
    %0 = vector.load %arg1[%c0, %c0_0, %c0_1] : memref<8x8x32xf32, #tpu.memory_space<vmem>>, vector<8x8x32xf32>
    %c0_2 = arith.constant 0 : index
    %c0_3 = arith.constant 0 : index
    %1 = vector.load %arg2[%c0_2, %c0_3] : memref<1x32xf32, #tpu.memory_space<vmem>>, vector<1x32xf32>
    %2 = vector.shape_cast %1 : vector<1x32xf32> to vector<1x1x32xf32>
    %3 = vector.broadcast %2 : vector<1x1x32xf32> to vector<8x8x32xf32>
    %4 = arith.mulf %0, %3 : vector<8x8x32xf32>
    %cst = arith.constant dense<0.000000e+00> : vector<8x8xf32>
    %5 = vector.multi_reduction <add>, %4, %cst [2] : vector<8x8x32xf32> to vector<8x8xf32>
    %cst_4 = arith.constant dense<0xFF800000> : vector<8xf32>
    %6 = vector.multi_reduction <maximumf>, %5, %cst_4 [1] : vector<8x8xf32> to vector<8xf32>
    %7 = vector.shape_cast %6 : vector<8xf32> to vector<8x1xf32>
    %8 = vector.broadcast %7 : vector<8x1xf32> to vector<8x8xf32>
    %9 = arith.subf %5, %8 : vector<8x8xf32>
    %10 = math.exp %9 : vector<8x8xf32>
    %cst_5 = arith.constant dense<0.000000e+00> : vector<8xf32>
    %11 = vector.multi_reduction <add>, %10, %cst_5 [1] : vector<8x8xf32> to vector<8xf32>
    %12 = vector.shape_cast %11 : vector<8xf32> to vector<8x1xf32>
    %13 = tpu.reciprocal %12 {approx = true} : vector<8x1xf32> -> vector<8x1xf32>
    %14 = arith.mulf %12, %13 : vector<8x1xf32>
    %cst_6 = arith.constant 2.000000e+00 : f32
    %15 = vector.broadcast %cst_6 : f32 to vector<8x1xf32>
    %16 = arith.subf %15, %14 : vector<8x1xf32>
    %17 = arith.mulf %13, %16 : vector<8x1xf32>
    %18 = vector.broadcast %17 : vector<8x1xf32> to vector<8x8xf32>
    %19 = arith.mulf %10, %18 : vector<8x8xf32>
    %20 = vector.shape_cast %19 : vector<8x8xf32> to vector<8x8x1xf32>
    %21 = vector.broadcast %20 : vector<8x8x1xf32> to vector<8x8x32xf32>
    %22 = arith.mulf %21, %0 : vector<8x8x32xf32>
    %cst_7 = arith.constant dense<0.000000e+00> : vector<8x32xf32>
    %23 = vector.multi_reduction <add>, %22, %cst_7 [1] : vector<8x8x32xf32> to vector<8x32xf32>
    %c0_8 = arith.constant 0 : index
    %c0_9 = arith.constant 0 : index
    %24 = vector.load %arg3[%c0_8, %c0_9] : memref<8x32xf32, #tpu.memory_space<vmem>>, vector<8x32xf32>
    tpu.vector_store %arg3[%c0_8, %c0_9], %23 {strides = array<i32>} : memref<8x32xf32, #tpu.memory_space<vmem>>, vector<8x32xf32>,
    %c0_10 = arith.constant 0 : index
    %c0_11 = arith.constant 0 : index
    %25 = vector.load %arg4[%c0_10, %c0_11] : memref<8x8xf32, #tpu.memory_space<vmem>>, vector<8x8xf32>
    tpu.vector_store %arg4[%c0_10, %c0_11], %19 {strides = array<i32>} : memref<8x8xf32, #tpu.memory_space<vmem>>, vector<8x8xf32>,
    return
  }
  func.func @transform_0(%arg0: i32) -> (i32, i32, i32) {
    %c0_i32 = arith.constant 0 : i32
    %c0_i32_0 = arith.constant 0 : i32
    %c0_i32_1 = arith.constant 0 : i32
    return %arg0, %c0_i32, %c0_i32_0 : i32, i32, i32
  }
  func.func @transform_1(%arg0: i32) -> (i32, i32) {
    %c0_i32 = arith.constant 0 : i32
    %c0_i32_0 = arith.constant 0 : i32
    %c0_i32_1 = arith.constant 0 : i32
    return %c0_i32, %c0_i32_0 : i32, i32
  }
  func.func @transform_2(%arg0: i32) -> (i32, i32) {
    %c0_i32 = arith.constant 0 : i32
    %c0_i32_0 = arith.constant 0 : i32
    return %arg0, %c0_i32 : i32, i32
  }
  func.func @transform_3(%arg0: i32) -> (i32, i32) {
    %c0_i32 = arith.constant 0 : i32
    %c0_i32_0 = arith.constant 0 : i32
    return %arg0, %c0_i32 : i32, i32
  }
}

</mosaic_0001>

<llo_original>
// kernel: tpu_custom_call.1
$region0: #{tpu_custom_call.1}
  #allocation0 [shape = 'u32[]', space=smem, size = 0x4, offset = 0x4, fixed_abs, tag = 'smem constant byte address 0x4 - core index']
  #allocation1 [shape = 'u32[144,128]{1,0:T(1,128)}', space=vmem, size = 0x12000, scoped, tag = 'internal scratch']
  %s0 = inlined_call_operand.hbm [shape: f32[16,8,32], index: 0, kind: input, shape index: {}]
  %s1 = inlined_call_operand.vmem [shape: f32[1,32], index: 1, kind: input, shape index: {}]
  %s2 = inlined_call_operand.hbm [shape: f32[16,32], index: 2, kind: output, shape index: {0}]
  %s3 = inlined_call_operand.vmem [shape: f32[16,8], index: 3, kind: output, shape index: {1}]
  %4 = xla_tuple %s2, %s3
  %s5 = sld [smem:[#allocation0]]
  $region53: #{tpu_custom_call.1} parent=0
    _
  %s7 = ssub.s32 1, %s5
  %s8 = scalar_select 0, %s7, %s5
  $region1: #{tpu_custom_call.1} parent=0
    #allocation2 [shape = 'u8[65536]{0}', space=vmem, size = 0x10000, scoped, tag = 'input window, operand 0']
    #allocation3 [shape = 's32[2]{0}', space=sflag, size = 0x8, scoped, tag = 'scoped memory for tpu_custom_call.1']
    #allocation4 [shape = 's32[2]{0}', space=sflag, size = 0x8, scoped, tag = 'scoped memory for tpu_custom_call.1']
    #allocation5 [shape = 'u8[8192]{0}', space=vmem, size = 0x2000, scoped, tag = 'output window, operand 0']
    %9 = vsyncpa [#allocation3], 0
    %s10 = scalar_lea.sflag [#allocation3], 1
    %11 = vsyncpa %s10, 0
    %12 = vsyncpa [#allocation4], 0
    %s13 = scalar_lea.sflag [#allocation4], 1
    %14 = vsyncpa %s13, 0
    loop: start=0, step=1, limit=4
    $region2: #{tpu_custom_call.1} parent=1 // loop_pre_header
      _
    $region3: #{tpu_custom_call.1} parent=1 // loop_header
      %s16 = sphi 0, %s20
      %p17 = scmp.ge.s32.totalorder %s16, 4
      %s26 = sphi 0, %s28
      %s29 = sphi 0, %s26
      %s30 = sphi 0, %s29
      %s46 = sphi 0, %s30
      %s50 = sphi 0, %s50
      %s52 = sphi 0, %s50
      %s53 = sphi 0, %s52
      %s67 = sphi 0, %s53
      %s73 = sphi 0, %s75
      %s76 = sphi 0, %s73
      %s77 = sphi 0, %s76
      %s93 = sphi 0, %s77
      %s99 = sphi 0, %s101
      %s102 = sphi 0, %s99
      %s103 = sphi 0, %s102
      %s119 = sphi 0, %s103
    $region4: #{tpu_custom_call.1} parent=1 // loop_header_branch
      %19 = sbr.rel (%p17) target = $region8
    $region5: #{tpu_custom_call.1} parent=1 // loop_body
      %s21 = ssub.s32 %s16, 1
      %s22 = ssub.s32 %s16, 2
      %s23 = sadd.s32 %s16, 1
      %s24 = ssub.s32 %s16, %s23
      %p25 = scmp.eq.s32.totalorder %s24, 0
      %s27 = sadd.s32 %s26, 1
      %s28 = scalar_select %p25, %s26, %s27
      %p31 = pneg %p25
      %p32 = scmp.eq.s32.totalorder %s16, 1
      %p33 = por %p31, %p32
      %p34 = scmp.ne.s32.totalorder %s26, %s29
      %p35 = scmp.eq.s32.totalorder %s16, 0
      %p36 = por %p34, %p35
      %p37 = scmp.ne.s32.totalorder %s26, %s29
      %p38 = scmp.eq.s32.totalorder %s21, 1
      %p39 = por %p37, %p38
      %p40 = scmp.ne.s32.totalorder %s29, %s30
      %p41 = scmp.eq.s32.totalorder %s21, 0
      %p42 = por %p40, %p41
      %p43 = scmp.ne.s32.totalorder %s29, %s30
      %p44 = scmp.eq.s32.totalorder %s22, 1
      %p45 = por %p43, %p44
      %p47 = scmp.ne.s32.totalorder %s30, %s46
      %p48 = scmp.eq.s32.totalorder %s22, 0
      %p49 = por %p47, %p48
      %s51 = sadd.s32 %s50, 1
      %p54 = scmp.eq.s32.totalorder %s16, 1
      %p55 = scmp.ne.s32.totalorder %s50, %s52
      %p56 = scmp.eq.s32.totalorder %s16, 0
      %p57 = por %p55, %p56
      %p58 = scmp.ne.s32.totalorder %s50, %s52
      %p59 = scmp.eq.s32.totalorder %s21, 1
      %p60 = por %p58, %p59
      %p61 = scmp.ne.s32.totalorder %s52, %s53
      %p62 = scmp.eq.s32.totalorder %s21, 0
      %p63 = por %p61, %p62
      %p64 = scmp.ne.s32.totalorder %s52, %s53
      %p65 = scmp.eq.s32.totalorder %s22, 1
      %p66 = por %p64, %p65
      %p68 = scmp.ne.s32.totalorder %s53, %s67
      %p69 = scmp.eq.s32.totalorder %s22, 0
      %p70 = por %p68, %p69
      %s71 = ssub.s32 %s16, %s23
      %p72 = scmp.eq.s32.totalorder %s71, 0
      %s74 = sadd.s32 %s73, 1
      %s75 = scalar_select %p72, %s73, %s74
      %p78 = pneg %p72
      %p79 = scmp.eq.s32.totalorder %s16, 1
      %p80 = por %p78, %p79
      %p81 = scmp.ne.s32.totalorder %s73, %s76
      %p82 = scmp.eq.s32.totalorder %s16, 0
      %p83 = por %p81, %p82
      %p84 = scmp.ne.s32.totalorder %s73, %s76
      %p85 = scmp.eq.s32.totalorder %s21, 1
      %p86 = por %p84, %p85
      %p87 = scmp.ne.s32.totalorder %s76, %s77
      %p88 = scmp.eq.s32.totalorder %s21, 0
      %p89 = por %p87, %p88
      %p90 = scmp.ne.s32.totalorder %s76, %s77
      %p91 = scmp.eq.s32.totalorder %s22, 1
      %p92 = por %p90, %p91
      %p94 = scmp.ne.s32.totalorder %s77, %s93
      %p95 = scmp.eq.s32.totalorder %s22, 0
      %p96 = por %p94, %p95
      %s97 = ssub.s32 %s16, %s23
      %p98 = scmp.eq.s32.totalorder %s97, 0
      %s100 = sadd.s32 %s99, 1
      %s101 = scalar_select %p98, %s99, %s100
      %p104 = pneg %p98
      %p105 = scmp.eq.s32.totalorder %s16, 1
      %p106 = por %p104, %p105
      %p107 = scmp.ne.s32.totalorder %s99, %s102
      %p108 = scmp.eq.s32.totalorder %s16, 0
      %p109 = por %p107, %p108
      %p110 = scmp.ne.s32.totalorder %s99, %s102
      %p111 = scmp.eq.s32.totalorder %s21, 1
      %p112 = por %p110, %p111
      %p113 = scmp.ne.s32.totalorder %s102, %s103
      %p114 = scmp.eq.s32.totalorder %s21, 0
      %p115 = por %p113, %p114
      %p116 = scmp.ne.s32.totalorder %s102, %s103
      %p117 = scmp.eq.s32.totalorder %s22, 1
      %p118 = por %p116, %p117
      %p120 = scmp.ne.s32.totalorder %s103, %s119
      %p121 = scmp.eq.s32.totalorder %s22, 0
      %p122 = por %p120, %p121
      %p123 = scmp.le.s32.totalorder 1, %s16
      %p124 = scmp.lt.s32.totalorder %s16, 3
      %p125 = pnand %p123, %p124
      %p126 = pneg %p125
      // Predicated region
      $region9: #{tpu_custom_call.1} parent=5 // pred_check
        _
      $region10: #{tpu_custom_call.1} parent=5 // pred_check_branch
        %128 = sbr.rel (%p125) target = $region12
      $region11: #{tpu_custom_call.1} parent=5 // pred_region
        %s129 = ssub.s32 %s16, 1
        // Predicated region
        $region13: #{tpu_custom_call.1} parent=11 // pred_check
          %p130 = pneg %p63
        $region14: #{tpu_custom_call.1} parent=11 // pred_check_branch
          %132 = sbr.rel (%p130) target = $region16
        $region15: #{tpu_custom_call.1} parent=11 // pred_region
          _
        $region16: #{tpu_custom_call.1} parent=11 // pred_fallthru
          _
      $region12: #{tpu_custom_call.1} parent=5 // pred_fallthru
        _
      %p133 = scmp.lt.s32.totalorder %s16, 2
      // Predicated region
      $region17: #{tpu_custom_call.1} parent=5 // pred_check
        %p134 = pneg %p133
      $region18: #{tpu_custom_call.1} parent=5 // pred_check_branch
        %136 = sbr.rel (%p134) target = $region20
      $region19: #{tpu_custom_call.1} parent=5 // pred_region
        // Predicated region
        $region21: #{tpu_custom_call.1} parent=19 // pred_check
          %p137 = pneg %p36
        $region22: #{tpu_custom_call.1} parent=19 // pred_check_branch
          %139 = sbr.rel (%p137) target = $region24
        $region23: #{tpu_custom_call.1} parent=19 // pred_region
          %s140 = sand.u32 %s26, 1
          %s141 = scalar_lea.sflag [#allocation3], %s140
          %s142 = sand.u32 %s26, 1
          %s143 = smul.addr %s142, 64
          %s144 = scalar_lea.vmem [#allocation2], %s143
          %s145 = smul.u32 8, %s16
          %s147 = ssub.s32 1024, 1024
          %148 = vsyncadd %s141, %s147
          %s149 = smul.addr %s145, 128
          %s150 = scalar_lea.hbm %s0, %s149
          %s151 = sshll.u32 %s144, 4
          %s152 = int_to_ptr.vmem [resolvable:$true] %s151
          %157 = dma.hbm_to_vmem [thread:$0]  %s150, 1024, %s152, %s141, 128, 128, 8
        $region24: #{tpu_custom_call.1} parent=19 // pred_fallthru
          _
      $region20: #{tpu_custom_call.1} parent=5 // pred_fallthru
        _
      %p158 = scmp.le.s32.totalorder 1, %s16
      %p159 = scmp.lt.s32.totalorder %s16, 3
      %p160 = pnand %p158, %p159
      %p161 = pneg %p160
      // Predicated region
      $region25: #{tpu_custom_call.1} parent=5 // pred_check
        _
      $region26: #{tpu_custom_call.1} parent=5 // pred_check_branch
        %163 = sbr.rel (%p160) target = $region28
      $region27: #{tpu_custom_call.1} parent=5 // pred_region
        %s164 = ssub.s32 %s16, 1
        %s165 = sand.u32 %s29, 1
        %s166 = scalar_lea.sflag [#allocation3], %s165
        %s167 = sand.u32 %s29, 1
        %s168 = smul.addr %s167, 64
        %s169 = scalar_lea.vmem [#allocation2], %s168
        // Predicated region
        $region29: #{tpu_custom_call.1} parent=27 // pred_check
          %p170 = pneg %p42
        $region30: #{tpu_custom_call.1} parent=27 // pred_check_branch
          %172 = sbr.rel (%p170) target = $region32
        $region31: #{tpu_custom_call.1} parent=27 // pred_region
          %173 = dma.done %s166, 1024
        $region32: #{tpu_custom_call.1} parent=27 // pred_fallthru
          _
        %s174 = sand.u32 %s29, 1
        %s175 = scalar_lea.sflag [#allocation3], %s174
        %s176 = sand.u32 %s29, 1
        %s177 = smul.addr %s176, 64
        %s178 = scalar_lea.vmem [#allocation2], %s177
        %p179 = pneg %p42
        %p180 = pneg %p39
        %p181 = pneg %p63
        %p182 = pneg %p60
        %p183 = pneg %p89
        %p184 = pneg %p86
        %s185 = sand.u32 %s76, 1
        %s186 = scalar_lea.sflag [#allocation4], %s185
        %s187 = sand.u32 %s76, 1
        %s188 = smul.addr %s187, 8
        %s189 = scalar_lea.vmem [#allocation5], %s188
        %p190 = pneg %p115
        %p191 = pneg %p112
        %p192 = scmp.lt.s32.totalorder %s21, 1
        %s193 = scalar_select %p192, %s21, 1
        %s194 = smul.addr %s193, 8
        %s195 = scalar_lea.vmem %s3, %s194
        %s196 = smul.u32 8, %s21
        %p197 = scmp.lt.s32.totalorder %s21, 1
        %s198 = scalar_select %p197, %s21, 1
        %s199 = smul.addr %s198, 8
        %s200 = scalar_lea.vmem %s3, %s199
        %v201 = vld [vmem:[%s169] sm:$0xff]
        %v202 = vld [vmem:[%s169 + $0x8] sm:$0xff]
        %v203 = vld [vmem:[%s169 + $0x10] sm:$0xff]
        %v204 = vld [vmem:[%s169 + $0x18] sm:$0xff]
        %v205 = vld [vmem:[%s169 + $0x20] sm:$0xff]
        %v206 = vld [vmem:[%s169 + $0x28] sm:$0xff]
        %v207 = vld [vmem:[%s169 + $0x30] sm:$0xff]
        %v208 = vld [vmem:[%s169 + $0x38] sm:$0xff]
        %v209 = vld [vmem:[%s1] sm:$0x1]
        %v211 = vlaneseq
        %v212 = vshrl.u32 %v211, 7
        %v213 = vsub.s32 0, %v212
        %v214 = vrot.slane %v209, %v213
        %v216 = vmul.f32 %v201, %v214
        %v217 = vmul.f32 %v202, %v214
        %v218 = vmul.f32 %v203, %v214
        %v219 = vmul.f32 %v204, %v214
        %v220 = vmul.f32 %v205, %v214
        %v221 = vmul.f32 %v206, %v214
        %v222 = vmul.f32 %v207, %v214
        %v223 = vmul.f32 %v208, %v214
        %vm224 = vcmask 261120
        %v225 = vsel %vm224, %v216, 0.0
        %226 = vadd.xlane.f32.xlu0 %v225
        %v227 = vpop.xlane.xlu0 %226
        %v228 = vsel %vm224, %v217, 0.0
        %229 = vadd.xlane.f32.xlu0 %v228
        %v230 = vpop.xlane.xlu0 %229
        %v231 = vsel %vm224, %v218, 0.0
        %232 = vadd.xlane.f32.xlu0 %v231
        %v233 = vpop.xlane.xlu0 %232
        %v234 = vsel %vm224, %v219, 0.0
        %235 = vadd.xlane.f32.xlu0 %v234
        %v236 = vpop.xlane.xlu0 %235
        %v237 = vsel %vm224, %v220, 0.0
        %238 = vadd.xlane.f32.xlu0 %v237
        %v239 = vpop.xlane.xlu0 %238
        %v240 = vsel %vm224, %v221, 0.0
        %241 = vadd.xlane.f32.xlu0 %v240
        %v242 = vpop.xlane.xlu0 %241
        %v243 = vsel %vm224, %v222, 0.0
        %244 = vadd.xlane.f32.xlu0 %v243
        %v245 = vpop.xlane.xlu0 %244
        %v246 = vsel %vm224, %v223, 0.0
        %247 = vadd.xlane.f32.xlu0 %v246
        %v248 = vpop.xlane.xlu0 %247
        %v257 = vlaneseq
        %v258 = vand.u32 %v257, 127
        %v259 = vlaneseq
        %v260 = vshrl.u32 %v259, 7
        %v261 = vsub.s32 %v258, %v260
        %v262 = vrot.slane %v227, %v261
        %v263 = vlaneseq
        %v264 = vshrl.u32 %v263, 7
        %v265 = vsub.s32 %v258, %v264
        %v266 = vrot.slane %v230, %v265
        %v267 = vlaneseq
        %v268 = vshrl.u32 %v267, 7
        %v269 = vsub.s32 %v258, %v268
        %v270 = vrot.slane %v233, %v269
        %v271 = vlaneseq
        %v272 = vshrl.u32 %v271, 7
        %v273 = vsub.s32 %v258, %v272
        %v274 = vrot.slane %v236, %v273
        %v275 = vlaneseq
        %v276 = vshrl.u32 %v275, 7
        %v277 = vsub.s32 %v258, %v276
        %v278 = vrot.slane %v239, %v277
        %v279 = vlaneseq
        %v280 = vshrl.u32 %v279, 7
        %v281 = vsub.s32 %v258, %v280
        %v282 = vrot.slane %v242, %v281
        %v283 = vlaneseq
        %v284 = vshrl.u32 %v283, 7
        %v285 = vsub.s32 %v258, %v284
        %v286 = vrot.slane %v245, %v285
        %v287 = vlaneseq
        %v288 = vshrl.u32 %v287, 7
        %v289 = vsub.s32 %v258, %v288
        %v290 = vrot.slane %v248, %v289
        %vm291 = vcmask 1041409
        %v292 = vsel %vm291, %v266, %v262
        %vm293 = vcmask 1042434
        %v294 = vsel %vm293, %v270, %v292
        %vm295 = vcmask 1043459
        %v296 = vsel %vm295, %v274, %v294
        %vm297 = vcmask 1044484
        %v298 = vsel %vm297, %v278, %v296
        %vm299 = vcmask 1045509
        %v300 = vsel %vm299, %v282, %v298
        %vm301 = vcmask 1046534
        %v302 = vsel %vm301, %v286, %v300
        %vm303 = vcmask 1047559
        %v304 = vsel %vm303, %v290, %v302
        %vm306 = vcmask 64512
        %v307 = vsel %vm306, %v304, -inf
        %308 = vmax.xlane.f32.xlu0 %v307
        %v309 = vpop.xlane.xlu0 %308
        %v311 = vlaneseq
        %v312 = vshrl.u32 %v311, 7
        %v313 = vsub.s32 0, %v312
        %v314 = vrot.slane %v309, %v313
        %v315 = vlaneseq
        %v316 = vshrl.u32 %v315, 7
        %v317 = vsub.s32 1, %v316
        %v318 = vrot.slane %v309, %v317
        %v319 = vlaneseq
        %v320 = vshrl.u32 %v319, 7
        %v321 = vsub.s32 2, %v320
        %v322 = vrot.slane %v309, %v321
        %v323 = vlaneseq
        %v324 = vshrl.u32 %v323, 7
        %v325 = vsub.s32 3, %v324
        %v326 = vrot.slane %v309, %v325
        %v327 = vlaneseq
        %v328 = vshrl.u32 %v327, 7
        %v329 = vsub.s32 4, %v328
        %v330 = vrot.slane %v309, %v329
        %v331 = vlaneseq
        %v332 = vshrl.u32 %v331, 7
        %v333 = vsub.s32 5, %v332
        %v334 = vrot.slane %v309, %v333
        %v335 = vlaneseq
        %v336 = vshrl.u32 %v335, 7
        %v337 = vsub.s32 6, %v336
        %v338 = vrot.slane %v309, %v337
        %v339 = vlaneseq
        %v340 = vshrl.u32 %v339, 7
        %v341 = vsub.s32 7, %v340
        %v342 = vrot.slane %v309, %v341
        %v351 = vsub.f32 %v227, %v314
        %v352 = vsub.f32 %v230, %v318
        %v353 = vsub.f32 %v233, %v322
        %v354 = vsub.f32 %v236, %v326
        %v355 = vsub.f32 %v239, %v330
        %v356 = vsub.f32 %v242, %v334
        %v357 = vsub.f32 %v245, %v338
        %v358 = vsub.f32 %v248, %v342
        %v359 = vmul.f32 %v351, 1.442695
        %v360 = vpow.pop %v359
        %v361 = vmul.f32 %v352, 1.442695
        %v362 = vpow.pop %v361
        %v363 = vmul.f32 %v353, 1.442695
        %v364 = vpow.pop %v363
        %v365 = vmul.f32 %v354, 1.442695
        %v366 = vpow.pop %v365
        %v367 = vmul.f32 %v355, 1.442695
        %v368 = vpow.pop %v367
        %v369 = vmul.f32 %v356, 1.442695
        %v370 = vpow.pop %v369
        %v371 = vmul.f32 %v357, 1.442695
        %v372 = vpow.pop %v371
        %v373 = vmul.f32 %v358, 1.442695
        %v374 = vpow.pop %v373
        %383 = vset.pattern.permute.xlu0 0
        %384 = vperm.xlu0 %383, %v360
        %v385 = vpop.permute.xlu0 %384
        %386 = vset.pattern.permute.xlu0 0
        %387 = vperm.xlu0 %386, %v362
        %v388 = vpop.permute.xlu0 %387
        %389 = vset.pattern.permute.xlu0 0
        %390 = vperm.xlu0 %389, %v364
        %v391 = vpop.permute.xlu0 %390
        %392 = vset.pattern.permute.xlu0 0
        %393 = vperm.xlu0 %392, %v366
        %v394 = vpop.permute.xlu0 %393
        %395 = vset.pattern.permute.xlu0 0
        %396 = vperm.xlu0 %395, %v368
        %v397 = vpop.permute.xlu0 %396
        %398 = vset.pattern.permute.xlu0 0
        %399 = vperm.xlu0 %398, %v370
        %v400 = vpop.permute.xlu0 %399
        %401 = vset.pattern.permute.xlu0 0
        %402 = vperm.xlu0 %401, %v372
        %v403 = vpop.permute.xlu0 %402
        %404 = vset.pattern.permute.xlu0 0
        %405 = vperm.xlu0 %404, %v374
        %v406 = vpop.permute.xlu0 %405
        %v407 = vlaneseq
        %v408 = vshrl.u32 %v407, 7
        %v409 = vsub.s32 %v258, %v408
        %v410 = vrot.slane %v385, %v409
        %v411 = vlaneseq
        %v412 = vshrl.u32 %v411, 7
        %v413 = vsub.s32 %v258, %v412
        %v414 = vrot.slane %v388, %v413
        %v415 = vlaneseq
        %v416 = vshrl.u32 %v415, 7
        %v417 = vsub.s32 %v258, %v416
        %v418 = vrot.slane %v391, %v417
        %v419 = vlaneseq
        %v420 = vshrl.u32 %v419, 7
        %v421 = vsub.s32 %v258, %v420
        %v422 = vrot.slane %v394, %v421
        %v423 = vlaneseq
        %v424 = vshrl.u32 %v423, 7
        %v425 = vsub.s32 %v258, %v424
        %v426 = vrot.slane %v397, %v425
        %v427 = vlaneseq
        %v428 = vshrl.u32 %v427, 7
        %v429 = vsub.s32 %v258, %v428
        %v430 = vrot.slane %v400, %v429
        %v431 = vlaneseq
        %v432 = vshrl.u32 %v431, 7
        %v433 = vsub.s32 %v258, %v432
        %v434 = vrot.slane %v403, %v433
        %v435 = vlaneseq
        %v436 = vshrl.u32 %v435, 7
        %v437 = vsub.s32 %v258, %v436
        %v438 = vrot.slane %v406, %v437
        %v439 = vsel %vm291, %v414, %v410
        %v440 = vsel %vm293, %v418, %v439
        %v441 = vsel %vm295, %v422, %v440
        %v442 = vsel %vm297, %v426, %v441
        %v443 = vsel %vm299, %v430, %v442
        %v444 = vsel %vm301, %v434, %v443
        %v445 = vsel %vm303, %v438, %v444
        %v447 = vsel %vm306, %v445, 0.0
        %448 = vadd.xlane.f32.xlu0 %v447
        %v449 = vpop.xlane.xlu0 %448
        %v450 = vrcp.pop %v449
        %v451 = vmul.f32 %v449, %v450
        %v452 = vsub.f32 2.0, %v451
        %v453 = vmul.f32 %v450, %v452
        %v455 = vlaneseq
        %v456 = vshrl.u32 %v455, 7
        %v457 = vsub.s32 0, %v456
        %v458 = vrot.slane %v453, %v457
        %v459 = vlaneseq
        %v460 = vshrl.u32 %v459, 7
        %v461 = vsub.s32 1, %v460
        %v462 = vrot.slane %v453, %v461
        %v463 = vlaneseq
        %v464 = vshrl.u32 %v463, 7
        %v465 = vsub.s32 2, %v464
        %v466 = vrot.slane %v453, %v465
        %v467 = vlaneseq
        %v468 = vshrl.u32 %v467, 7
        %v469 = vsub.s32 3, %v468
        %v470 = vrot.slane %v453, %v469
        %v471 = vlaneseq
        %v472 = vshrl.u32 %v471, 7
        %v473 = vsub.s32 4, %v472
        %v474 = vrot.slane %v453, %v473
        %v475 = vlaneseq
        %v476 = vshrl.u32 %v475, 7
        %v477 = vsub.s32 5, %v476
        %v478 = vrot.slane %v453, %v477
        %v479 = vlaneseq
        %v480 = vshrl.u32 %v479, 7
        %v481 = vsub.s32 6, %v480
        %v482 = vrot.slane %v453, %v481
        %v483 = vlaneseq
        %v484 = vshrl.u32 %v483, 7
        %v485 = vsub.s32 7, %v484
        %v486 = vrot.slane %v453, %v485
        %v495 = vmul.f32 %v360, %v458
        %v496 = vmul.f32 %v362, %v462
        %v497 = vmul.f32 %v364, %v466
        %v498 = vmul.f32 %v366, %v470
        %v499 = vmul.f32 %v368, %v474
        %v500 = vmul.f32 %v370, %v478
        %v501 = vmul.f32 %v372, %v482
        %v502 = vmul.f32 %v374, %v486
        %504 = vset.pattern.permute.xlu0 0
        %505 = vperm.xlu0 %504, %v495
        %v506 = vpop.permute.xlu0 %505
        %509 = vset.pattern.permute.xlu0 0
        %510 = vperm.xlu0 %509, %v496
        %v511 = vpop.permute.xlu0 %510
        %514 = vset.pattern.permute.xlu0 0
        %515 = vperm.xlu0 %514, %v497
        %v516 = vpop.permute.xlu0 %515
        %519 = vset.pattern.permute.xlu0 0
        %520 = vperm.xlu0 %519, %v498
        %v521 = vpop.permute.xlu0 %520
        %524 = vset.pattern.permute.xlu0 0
        %525 = vperm.xlu0 %524, %v499
        %v526 = vpop.permute.xlu0 %525
        %529 = vset.pattern.permute.xlu0 0
        %530 = vperm.xlu0 %529, %v500
        %v531 = vpop.permute.xlu0 %530
        %534 = vset.pattern.permute.xlu0 0
        %535 = vperm.xlu0 %534, %v501
        %v536 = vpop.permute.xlu0 %535
        %539 = vset.pattern.permute.xlu0 0
        %540 = vperm.xlu0 %539, %v502
        %v541 = vpop.permute.xlu0 %540
        %v543 = vmul.f32 %v506, %v201
        %v544 = vmul.f32 %v511, %v202
        %v545 = vmul.f32 %v516, %v203
        %v546 = vmul.f32 %v521, %v204
        %v547 = vmul.f32 %v526, %v205
        %v548 = vmul.f32 %v531, %v206
        %v549 = vmul.f32 %v536, %v207
        %v550 = vmul.f32 %v541, %v208
        %v551 = vsel %vm224, %v543, 0.0
        %v552 = vrot.slane %v551, 4
        %v553 = vadd.f32 %v551, %v552
        %v554 = vrot.slane %v553, 2
        %v555 = vadd.f32 %v553, %v554
        %v556 = vrot.slane %v555, 1
        %v557 = vadd.f32 %v555, %v556
        %v558 = vsel %vm224, %v544, 0.0
        %v559 = vrot.slane %v558, 4
        %v560 = vadd.f32 %v558, %v559
        %v561 = vrot.slane %v560, 2
        %v562 = vadd.f32 %v560, %v561
        %v563 = vrot.slane %v562, 1
        %v564 = vadd.f32 %v562, %v563
        %v565 = vsel %vm224, %v545, 0.0
        %v566 = vrot.slane %v565, 4
        %v567 = vadd.f32 %v565, %v566
        %v568 = vrot.slane %v567, 2
        %v569 = vadd.f32 %v567, %v568
        %v570 = vrot.slane %v569, 1
        %v571 = vadd.f32 %v569, %v570
        %v572 = vsel %vm224, %v546, 0.0
        %v573 = vrot.slane %v572, 4
        %v574 = vadd.f32 %v572, %v573
        %v575 = vrot.slane %v574, 2
        %v576 = vadd.f32 %v574, %v575
        %v577 = vrot.slane %v576, 1
        %v578 = vadd.f32 %v576, %v577
        %v579 = vsel %vm224, %v547, 0.0
        %v580 = vrot.slane %v579, 4
        %v581 = vadd.f32 %v579, %v580
        %v582 = vrot.slane %v581, 2
        %v583 = vadd.f32 %v581, %v582
        %v584 = vrot.slane %v583, 1
        %v585 = vadd.f32 %v583, %v584
        %v586 = vsel %vm224, %v548, 0.0
        %v587 = vrot.slane %v586, 4
        %v588 = vadd.f32 %v586, %v587
        %v589 = vrot.slane %v588, 2
        %v590 = vadd.f32 %v588, %v589
        %v591 = vrot.slane %v590, 1
        %v592 = vadd.f32 %v590, %v591
        %v593 = vsel %vm224, %v549, 0.0
        %v594 = vrot.slane %v593, 4
        %v595 = vadd.f32 %v593, %v594
        %v596 = vrot.slane %v595, 2
        %v597 = vadd.f32 %v595, %v596
        %v598 = vrot.slane %v597, 1
        %v599 = vadd.f32 %v597, %v598
        %v600 = vsel %vm224, %v550, 0.0
        %v601 = vrot.slane %v600, 4
        %v602 = vadd.f32 %v600, %v601
        %v603 = vrot.slane %v602, 2
        %v604 = vadd.f32 %v602, %v603
        %v605 = vrot.slane %v604, 1
        %v606 = vadd.f32 %v604, %v605
        %v615 = vsel %vm291, %v564, %v557
        %v616 = vsel %vm293, %v571, %v615
        %v617 = vsel %vm295, %v578, %v616
        %v618 = vsel %vm297, %v585, %v617
        %v619 = vsel %vm299, %v592, %v618
        %v620 = vsel %vm301, %v599, %v619
        %v621 = vsel %vm303, %v606, %v620
        %623 = vst.msk [vmem:[%s189] sm:$0xff] %vm224, %v621
        %v624 = vlaneseq
        %v625 = vshrl.u32 %v624, 7
        %v626 = vsub.s32 %v258, %v625
        %v627 = vrot.slane %v506, %v626
        %v628 = vlaneseq
        %v629 = vshrl.u32 %v628, 7
        %v630 = vsub.s32 %v258, %v629
        %v631 = vrot.slane %v511, %v630
        %v632 = vlaneseq
        %v633 = vshrl.u32 %v632, 7
        %v634 = vsub.s32 %v258, %v633
        %v635 = vrot.slane %v516, %v634
        %v636 = vlaneseq
        %v637 = vshrl.u32 %v636, 7
        %v638 = vsub.s32 %v258, %v637
        %v639 = vrot.slane %v521, %v638
        %v640 = vlaneseq
        %v641 = vshrl.u32 %v640, 7
        %v642 = vsub.s32 %v258, %v641
        %v643 = vrot.slane %v526, %v642
        %v644 = vlaneseq
        %v645 = vshrl.u32 %v644, 7
        %v646 = vsub.s32 %v258, %v645
        %v647 = vrot.slane %v531, %v646
        %v648 = vlaneseq
        %v649 = vshrl.u32 %v648, 7
        %v650 = vsub.s32 %v258, %v649
        %v651 = vrot.slane %v536, %v650
        %v652 = vlaneseq
        %v653 = vshrl.u32 %v652, 7
        %v654 = vsub.s32 %v258, %v653
        %v655 = vrot.slane %v541, %v654
        %v656 = vsel %vm291, %v631, %v627
        %v657 = vsel %vm293, %v635, %v656
        %v658 = vsel %vm295, %v639, %v657
        %v659 = vsel %vm297, %v643, %v658
        %v660 = vsel %vm299, %v647, %v659
        %v661 = vsel %vm301, %v651, %v660
        %v662 = vsel %vm303, %v655, %v661
        %664 = vst.msk [vmem:[%s200] sm:$0xff] %vm306, %v662
        %s665 = sand.u32 %s76, 1
        %s666 = scalar_lea.sflag [#allocation4], %s665
        %s667 = sand.u32 %s76, 1
        %s668 = smul.addr %s667, 8
        %s669 = scalar_lea.vmem [#allocation5], %s668
        %p670 = scmp.lt.s32.totalorder %s21, 1
        %s671 = scalar_select %p670, %s21, 1
        %s672 = smul.addr %s671, 8
        %s673 = scalar_lea.vmem %s3, %s672
        // Predicated region
        $region33: #{tpu_custom_call.1} parent=27 // pred_check
          %p674 = pneg %p86
        $region34: #{tpu_custom_call.1} parent=27 // pred_check_branch
          %676 = sbr.rel (%p674) target = $region36
        $region35: #{tpu_custom_call.1} parent=27 // pred_region
          %s678 = ssub.s32 128, 128
          %679 = vsyncadd %s666, %s678
          %s680 = smul.addr %s21, 128
          %s681 = scalar_lea.hbm %s2, %s680
          %s683 = sshll.u32 %s669, 4
          %s684 = int_to_ptr.vmem [resolvable:$true] %s683
          %686 = dma.vmem_to_hbm [thread:$0]  %s684, 128, %s681, %s666
        $region36: #{tpu_custom_call.1} parent=27 // pred_fallthru
          _
        // Predicated region
        $region37: #{tpu_custom_call.1} parent=27 // pred_check
          %p687 = pneg %p112
        $region38: #{tpu_custom_call.1} parent=27 // pred_check_branch
          %689 = sbr.rel (%p687) target = $region40
        $region39: #{tpu_custom_call.1} parent=27 // pred_region
          _
        $region40: #{tpu_custom_call.1} parent=27 // pred_fallthru
          _
      $region28: #{tpu_custom_call.1} parent=5 // pred_fallthru
        _
      %p690 = scmp.le.s32.totalorder 2, %s16
      // Predicated region
      $region41: #{tpu_custom_call.1} parent=5 // pred_check
        %p691 = pneg %p690
      $region42: #{tpu_custom_call.1} parent=5 // pred_check_branch
        %693 = sbr.rel (%p691) target = $region44
      $region43: #{tpu_custom_call.1} parent=5 // pred_region
        %s694 = ssub.s32 %s16, 2
        // Predicated region
        $region45: #{tpu_custom_call.1} parent=43 // pred_check
          %p695 = pneg %p92
        $region46: #{tpu_custom_call.1} parent=43 // pred_check_branch
          %697 = sbr.rel (%p695) target = $region48
        $region47: #{tpu_custom_call.1} parent=43 // pred_region
          %s698 = sand.u32 %s77, 1
          %s699 = scalar_lea.sflag [#allocation4], %s698
          %s700 = sand.u32 %s77, 1
          %s701 = smul.addr %s700, 8
          %s702 = scalar_lea.vmem [#allocation5], %s701
          %703 = dma.done %s699, 128
        $region48: #{tpu_custom_call.1} parent=43 // pred_fallthru
          _
        // Predicated region
        $region49: #{tpu_custom_call.1} parent=43 // pred_check
          %p704 = pneg %p118
        $region50: #{tpu_custom_call.1} parent=43 // pred_check_branch
          %706 = sbr.rel (%p704) target = $region52
        $region51: #{tpu_custom_call.1} parent=43 // pred_region
          %p707 = scmp.lt.s32.totalorder %s22, 1
          %s708 = scalar_select %p707, %s22, 1
          %s709 = smul.addr %s708, 8
          %s710 = scalar_lea.vmem %s3, %s709
        $region52: #{tpu_custom_call.1} parent=43 // pred_fallthru
          _
      $region44: #{tpu_custom_call.1} parent=5 // pred_fallthru
        _
    $region6: #{tpu_custom_call.1} parent=1 // loop_footer
      %s20 = sadd.s32 1, %s16
    $region7: #{tpu_custom_call.1} parent=1 // loop_footer_branch
      %15 = sbr.rel target = $region3
    $region8: #{tpu_custom_call.1} parent=1 // loop_exit
      _
    %711 = vsyncpa [#allocation3], 1
    %s712 = scalar_lea.sflag [#allocation3], 1
    %713 = vsyncpa %s712, 1
    %714 = vsyncpa [#allocation4], 1
    %s715 = scalar_lea.sflag [#allocation4], 1
    %716 = vsyncpa %s715, 1

</llo_original>
